<compile_context>
chip_gen: v6e
topology: v6e:2x2x1
jax: 0.10.0
libtpu: 0.0.40
codegen_flags: <defaults>
</compile_context>

<pallas_src>
import jax
import jax.numpy as jnp
from jax.experimental import pallas as pl
from jax.experimental.pallas import tpu as pltpu


def char_rnn_kernel(xpre_ref, whh_ref, wfc_ref, bfc_ref, out_ref):
    """Serial LSTM recurrence (input preactivations precomputed) + final FC.

    xpre_ref: (T, B, 4H) f32   x_t @ W_ih_all + (b_ih + b_hh), time-major
    whh_ref:  (H, 4H)    bf16  fused recurrent weights (gate order i,f,g,o)
    wfc_ref:  (H, Opad)  f32   FC weight, transposed + lane-padded
    bfc_ref:  (1, Opad)  f32
    out_ref:  (B, Opad)  f32
    """
    T, B, H4 = xpre_ref.shape
    H = H4 // 4

    w_hh = whh_ref[...]                       # load once, reuse every step (bf16)

    h = jnp.zeros((B, H), jnp.float32)
    c = jnp.zeros((B, H), jnp.float32)

    # T is static -> fully unrolled loop with h/c carried in vregs.
    for t in range(T):
        gates = xpre_ref[t] + jnp.dot(h.astype(jnp.bfloat16), w_hh,
                                      preferred_element_type=jnp.float32)
        # One wide sigmoid over the full (B, 4H) block + one tanh on the g slice.
        sig = jax.nn.sigmoid(gates)
        i_g = sig[:, 0:H]
        f_g = sig[:, H:2 * H]
        o_g = sig[:, 3 * H:4 * H]
        g_g = jnp.tanh(gates[:, 2 * H:3 * H])

        c = f_g * c + i_g * g_g
        h = o_g * jnp.tanh(c)

    # fc on the last hidden state (== output[:, -1, :] of the LSTM)
    out_ref[...] = (jnp.dot(h, wfc_ref[...],
                            preferred_element_type=jnp.float32)
                    + bfc_ref[...])


def char_rnn_forward(x, emb_table, w_ih, w_hh, b_ih, b_hh, w_fc, b_fc):
    """PyTorch-semantics forward of CharRNN.

    x:         (B, T) int32
    emb_table: (vocab, H)
    w_ih:      (4H, H)   PyTorch weight_ih_l0 (gate order i,f,g,o)
    w_hh:      (4H, H)   PyTorch weight_hh_l0
    b_ih,b_hh: (4H,)
    w_fc:      (O, H), b_fc: (O,)
    returns    (B, O) float32
    """
    B, T = x.shape
    H = emb_table.shape[1]
    O = w_fc.shape[0]
    O_pad = max(128, ((O + 127) // 128) * 128)   # lane-dense output stores

    # Fused, transposed gate weights: (H, 4H), column blocks [i | f | g | o].
    w_ih_all = w_ih.T.astype(jnp.float32)                    # (H, 4H)
    w_hh_all = w_hh.T.astype(jnp.bfloat16)                   # (H, 4H) bf16 MXU operand
    b_all = (b_ih + b_hh).reshape(1, 4 * H).astype(jnp.float32)

    # Time-major gather + hoisted input-side matmul: (T, B, 4H) preactivations.
    emb_tm = emb_table[x.T]                                  # (T, B, H)
    x_pre = (emb_tm.reshape(T * B, H) @ w_ih_all + b_all).reshape(T, B, 4 * H)
    x_pre = x_pre.astype(jnp.float32)

    # FC weight/bias transposed + padded to a full 128-lane output.
    w_fc_p = jnp.zeros((H, O_pad), jnp.float32).at[:, :O].set(w_fc.T)
    b_fc_p = jnp.zeros((1, O_pad), jnp.float32).at[0, :O].set(b_fc)

    # TODO(synk): if B grows, add a leading grid axis over batch with
    # dimension_semantics=("parallel",) so v7x's second TensorCore is used.
    vmem = pl.BlockSpec(memory_space=pltpu.MemorySpace.VMEM)
    out = pl.pallas_call(
        char_rnn_kernel,
        out_shape=jax.ShapeDtypeStruct((B, O_pad), jnp.float32),
        in_specs=[vmem] * 4,
        out_specs=vmem,
    )(x_pre, w_hh_all, w_fc_p, b_fc_p)
    return out[:, :O]


def reference_forward(x, emb_table, w_ih, w_hh, b_ih, b_hh, w_fc, b_fc):
    """Pure-JAX f32 reference matching torch.nn.LSTM semantics."""
    B, T = x.shape
    H = emb_table.shape[1]
    emb = emb_table[x]                                     # (B, T, H)
    h = jnp.zeros((B, H), jnp.float32)
    c = jnp.zeros((B, H), jnp.float32)
    for t in range(T):
        gates = emb[:, t, :] @ w_ih.T + b_ih + h @ w_hh.T + b_hh
        i = jax.nn.sigmoid(gates[:, 0:H])
        f = jax.nn.sigmoid(gates[:, H:2 * H])
        g = jnp.tanh(gates[:, 2 * H:3 * H])
        o = jax.nn.sigmoid(gates[:, 3 * H:4 * H])
        c = f * c + i * g
        h = o * jnp.tanh(c)
    return h @ w_fc.T + b_fc


if __name__ == "__main__":
    # Small shapes consistent with the module's forward.
    vocab_size = 16      # input_size
    hidden_size = 32
    output_size = 16
    batch, seq = 2, 8

    key = jax.random.PRNGKey(0)
    ks = jax.random.split(key, 8)

    # Deterministic synthetic parameters (PyTorch-like init scales).
    bound = 1.0 / jnp.sqrt(hidden_size)
    emb_table = jax.random.normal(ks[0], (vocab_size, hidden_size), jnp.float32)
    w_ih = jax.random.uniform(ks[1], (4 * hidden_size, hidden_size),
                              jnp.float32, -bound, bound)
    w_hh = jax.random.uniform(ks[2], (4 * hidden_size, hidden_size),
                              jnp.float32, -bound, bound)
    b_ih = jax.random.uniform(ks[3], (4 * hidden_size,), jnp.float32, -bound, bound)
    b_hh = jax.random.uniform(ks[4], (4 * hidden_size,), jnp.float32, -bound, bound)
    w_fc = jax.random.uniform(ks[5], (output_size, hidden_size),
                              jnp.float32, -bound, bound)
    b_fc = jax.random.uniform(ks[6], (output_size,), jnp.float32, -bound, bound)

    x = jax.random.randint(ks[7], (batch, seq), 0, vocab_size, jnp.int32)

    out = char_rnn_forward(x, emb_table, w_ih, w_hh, b_ih, b_hh, w_fc, b_fc)
    out = jax.block_until_ready(out)

    ref = reference_forward(x, emb_table, w_ih, w_hh, b_ih, b_hh, w_fc, b_fc)
    assert out.shape == (batch, output_size)
    # Recurrent matmul uses bf16 operands (f32 accumulation) -> relaxed tolerance.
    assert jnp.allclose(out, ref, atol=2e-2, rtol=2e-2), "mismatch vs reference"

    print("KERNEL_OK")
</pallas_src>

<mosaic_0001>
module attributes {stable_mosaic.version = 11 : i64} {
  func.func @char_rnn_kernel(%arg0: memref<8x2x128xf32, #tpu.memory_space<vmem>>, %arg1: memref<32x128xbf16, #tpu.memory_space<vmem>>, %arg2: memref<32x128xf32, #tpu.memory_space<vmem>>, %arg3: memref<1x128xf32, #tpu.memory_space<vmem>>, %arg4: memref<2x128xf32, #tpu.memory_space<vmem>>) attributes {dimension_semantics = [], scalar_prefetch = 0 : i64, scratch_operands = 0 : i64, tpu.core_type = #tpu.core_type<tc>} {
    %c0 = arith.constant 0 : index
    %c0_0 = arith.constant 0 : index
    %0 = vector.load %arg1[%c0, %c0_0] : memref<32x128xbf16, #tpu.memory_space<vmem>>, vector<32x128xbf16>
    %cst = arith.constant 0.000000e+00 : f32
    %1 = vector.broadcast %cst : f32 to vector<2x32xf32>
    %cst_1 = arith.constant 0.000000e+00 : f32
    %2 = vector.broadcast %cst_1 : f32 to vector<2x32xf32>
    %c0_2 = arith.constant 0 : index
    %c0_3 = arith.constant 0 : index
    %c0_4 = arith.constant 0 : index
    %3 = vector.load %arg0[%c0_2, %c0_3, %c0_4] : memref<8x2x128xf32, #tpu.memory_space<vmem>>, vector<1x2x128xf32>
    %4 = vector.shape_cast %3 : vector<1x2x128xf32> to vector<2x128xf32>
    %5 = arith.truncf %1 : vector<2x32xf32> to vector<2x32xbf16>
    %cst_5 = arith.constant dense<0.000000e+00> : vector<2x128xf32>
    %6 = tpu.matmul %5, %0, %cst_5 {dimension_numbers = #tpu.dot_dimension_numbers<[1], [0], [0], [1], [0, 0, 1, 1], [], []>} : vector<2x32xbf16>, vector<32x128xbf16>, vector<2x128xf32> -> vector<2x128xf32>
    %7 = arith.addf %4, %6 : vector<2x128xf32>
    %8 = arith.negf %7 : vector<2x128xf32>
    %9 = math.exp %8 : vector<2x128xf32>
    %cst_6 = arith.constant 1.000000e+00 : f32
    %10 = vector.broadcast %cst_6 : f32 to vector<2x128xf32>
    %11 = arith.addf %10, %9 : vector<2x128xf32>
    %12 = arith.divf %10, %11 : vector<2x128xf32>
    %13 = vector.extract_strided_slice %12 {offsets = [0, 0], sizes = [2, 32], strides = [1, 1]} : vector<2x128xf32> to vector<2x32xf32>
    %14 = vector.extract_strided_slice %12 {offsets = [0, 32], sizes = [2, 32], strides = [1, 1]} : vector<2x128xf32> to vector<2x32xf32>
    %15 = vector.extract_strided_slice %12 {offsets = [0, 96], sizes = [2, 32], strides = [1, 1]} : vector<2x128xf32> to vector<2x32xf32>
    %16 = vector.extract_strided_slice %7 {offsets = [0, 64], sizes = [2, 32], strides = [1, 1]} : vector<2x128xf32> to vector<2x32xf32>
    %17 = math.tanh %16 : vector<2x32xf32>
    %18 = arith.mulf %14, %2 : vector<2x32xf32>
    %19 = arith.mulf %13, %17 : vector<2x32xf32>
    %20 = arith.addf %18, %19 : vector<2x32xf32>
    %21 = math.tanh %20 : vector<2x32xf32>
    %22 = arith.mulf %15, %21 : vector<2x32xf32>
    %c1 = arith.constant 1 : index
    %c0_7 = arith.constant 0 : index
    %c0_8 = arith.constant 0 : index
    %23 = vector.load %arg0[%c1, %c0_7, %c0_8] : memref<8x2x128xf32, #tpu.memory_space<vmem>>, vector<1x2x128xf32>
    %24 = vector.shape_cast %23 : vector<1x2x128xf32> to vector<2x128xf32>
    %25 = arith.truncf %22 : vector<2x32xf32> to vector<2x32xbf16>
    %cst_9 = arith.constant dense<0.000000e+00> : vector<2x128xf32>
    %26 = tpu.matmul %25, %0, %cst_9 {dimension_numbers = #tpu.dot_dimension_numbers<[1], [0], [0], [1], [0, 0, 1, 1], [], []>} : vector<2x32xbf16>, vector<32x128xbf16>, vector<2x128xf32> -> vector<2x128xf32>
    %27 = arith.addf %24, %26 : vector<2x128xf32>
    %28 = arith.negf %27 : vector<2x128xf32>
    %29 = math.exp %28 : vector<2x128xf32>
    %cst_10 = arith.constant 1.000000e+00 : f32
    %30 = vector.broadcast %cst_10 : f32 to vector<2x128xf32>
    %31 = arith.addf %30, %29 : vector<2x128xf32>
    %32 = arith.divf %30, %31 : vector<2x128xf32>
    %33 = vector.extract_strided_slice %32 {offsets = [0, 0], sizes = [2, 32], strides = [1, 1]} : vector<2x128xf32> to vector<2x32xf32>
    %34 = vector.extract_strided_slice %32 {offsets = [0, 32], sizes = [2, 32], strides = [1, 1]} : vector<2x128xf32> to vector<2x32xf32>
    %35 = vector.extract_strided_slice %32 {offsets = [0, 96], sizes = [2, 32], strides = [1, 1]} : vector<2x128xf32> to vector<2x32xf32>
    %36 = vector.extract_strided_slice %27 {offsets = [0, 64], sizes = [2, 32], strides = [1, 1]} : vector<2x128xf32> to vector<2x32xf32>
    %37 = math.tanh %36 : vector<2x32xf32>
    %38 = arith.mulf %34, %20 : vector<2x32xf32>
    %39 = arith.mulf %33, %37 : vector<2x32xf32>
    %40 = arith.addf %38, %39 : vector<2x32xf32>
    %41 = math.tanh %40 : vector<2x32xf32>
    %42 = arith.mulf %35, %41 : vector<2x32xf32>
    %c2 = arith.constant 2 : index
    %c0_11 = arith.constant 0 : index
    %c0_12 = arith.constant 0 : index
    %43 = vector.load %arg0[%c2, %c0_11, %c0_12] : memref<8x2x128xf32, #tpu.memory_space<vmem>>, vector<1x2x128xf32>
    %44 = vector.shape_cast %43 : vector<1x2x128xf32> to vector<2x128xf32>
    %45 = arith.truncf %42 : vector<2x32xf32> to vector<2x32xbf16>
    %cst_13 = arith.constant dense<0.000000e+00> : vector<2x128xf32>
    %46 = tpu.matmul %45, %0, %cst_13 {dimension_numbers = #tpu.dot_dimension_numbers<[1], [0], [0], [1], [0, 0, 1, 1], [], []>} : vector<2x32xbf16>, vector<32x128xbf16>, vector<2x128xf32> -> vector<2x128xf32>
    %47 = arith.addf %44, %46 : vector<2x128xf32>
    %48 = arith.negf %47 : vector<2x128xf32>
    %49 = math.exp %48 : vector<2x128xf32>
    %cst_14 = arith.constant 1.000000e+00 : f32
    %50 = vector.broadcast %cst_14 : f32 to vector<2x128xf32>
    %51 = arith.addf %50, %49 : vector<2x128xf32>
    %52 = arith.divf %50, %51 : vector<2x128xf32>
    %53 = vector.extract_strided_slice %52 {offsets = [0, 0], sizes = [2, 32], strides = [1, 1]} : vector<2x128xf32> to vector<2x32xf32>
    %54 = vector.extract_strided_slice %52 {offsets = [0, 32], sizes = [2, 32], strides = [1, 1]} : vector<2x128xf32> to vector<2x32xf32>
    %55 = vector.extract_strided_slice %52 {offsets = [0, 96], sizes = [2, 32], strides = [1, 1]} : vector<2x128xf32> to vector<2x32xf32>
    %56 = vector.extract_strided_slice %47 {offsets = [0, 64], sizes = [2, 32], strides = [1, 1]} : vector<2x128xf32> to vector<2x32xf32>
    %57 = math.tanh %56 : vector<2x32xf32>
    %58 = arith.mulf %54, %40 : vector<2x32xf32>
    %59 = arith.mulf %53, %57 : vector<2x32xf32>
    %60 = arith.addf %58, %59 : vector<2x32xf32>
    %61 = math.tanh %60 : vector<2x32xf32>
    %62 = arith.mulf %55, %61 : vector<2x32xf32>
    %c3 = arith.constant 3 : index
    %c0_15 = arith.constant 0 : index
    %c0_16 = arith.constant 0 : index
    %63 = vector.load %arg0[%c3, %c0_15, %c0_16] : memref<8x2x128xf32, #tpu.memory_space<vmem>>, vector<1x2x128xf32>
    %64 = vector.shape_cast %63 : vector<1x2x128xf32> to vector<2x128xf32>
    %65 = arith.truncf %62 : vector<2x32xf32> to vector<2x32xbf16>
    %cst_17 = arith.constant dense<0.000000e+00> : vector<2x128xf32>
    %66 = tpu.matmul %65, %0, %cst_17 {dimension_numbers = #tpu.dot_dimension_numbers<[1], [0], [0], [1], [0, 0, 1, 1], [], []>} : vector<2x32xbf16>, vector<32x128xbf16>, vector<2x128xf32> -> vector<2x128xf32>
    %67 = arith.addf %64, %66 : vector<2x128xf32>
    %68 = arith.negf %67 : vector<2x128xf32>
    %69 = math.exp %68 : vector<2x128xf32>
    %cst_18 = arith.constant 1.000000e+00 : f32
    %70 = vector.broadcast %cst_18 : f32 to vector<2x128xf32>
    %71 = arith.addf %70, %69 : vector<2x128xf32>
    %72 = arith.divf %70, %71 : vector<2x128xf32>
    %73 = vector.extract_strided_slice %72 {offsets = [0, 0], sizes = [2, 32], strides = [1, 1]} : vector<2x128xf32> to vector<2x32xf32>
    %74 = vector.extract_strided_slice %72 {offsets = [0, 32], sizes = [2, 32], strides = [1, 1]} : vector<2x128xf32> to vector<2x32xf32>
    %75 = vector.extract_strided_slice %72 {offsets = [0, 96], sizes = [2, 32], strides = [1, 1]} : vector<2x128xf32> to vector<2x32xf32>
    %76 = vector.extract_strided_slice %67 {offsets = [0, 64], sizes = [2, 32], strides = [1, 1]} : vector<2x128xf32> to vector<2x32xf32>
    %77 = math.tanh %76 : vector<2x32xf32>
    %78 = arith.mulf %74, %60 : vector<2x32xf32>
    %79 = arith.mulf %73, %77 : vector<2x32xf32>
    %80 = arith.addf %78, %79 : vector<2x32xf32>
    %81 = math.tanh %80 : vector<2x32xf32>
    %82 = arith.mulf %75, %81 : vector<2x32xf32>
    %c4 = arith.constant 4 : index
    %c0_19 = arith.constant 0 : index
    %c0_20 = arith.constant 0 : index
    %83 = vector.load %arg0[%c4, %c0_19, %c0_20] : memref<8x2x128xf32, #tpu.memory_space<vmem>>, vector<1x2x128xf32>
    %84 = vector.shape_cast %83 : vector<1x2x128xf32> to vector<2x128xf32>
    %85 = arith.truncf %82 : vector<2x32xf32> to vector<2x32xbf16>
    %cst_21 = arith.constant dense<0.000000e+00> : vector<2x128xf32>
    %86 = tpu.matmul %85, %0, %cst_21 {dimension_numbers = #tpu.dot_dimension_numbers<[1], [0], [0], [1], [0, 0, 1, 1], [], []>} : vector<2x32xbf16>, vector<32x128xbf16>, vector<2x128xf32> -> vector<2x128xf32>
    %87 = arith.addf %84, %86 : vector<2x128xf32>
    %88 = arith.negf %87 : vector<2x128xf32>
    %89 = math.exp %88 : vector<2x128xf32>
    %cst_22 = arith.constant 1.000000e+00 : f32
    %90 = vector.broadcast %cst_22 : f32 to vector<2x128xf32>
    %91 = arith.addf %90, %89 : vector<2x128xf32>
    %92 = arith.divf %90, %91 : vector<2x128xf32>
    %93 = vector.extract_strided_slice %92 {offsets = [0, 0], sizes = [2, 32], strides = [1, 1]} : vector<2x128xf32> to vector<2x32xf32>
    %94 = vector.extract_strided_slice %92 {offsets = [0, 32], sizes = [2, 32], strides = [1, 1]} : vector<2x128xf32> to vector<2x32xf32>
    %95 = vector.extract_strided_slice %92 {offsets = [0, 96], sizes = [2, 32], strides = [1, 1]} : vector<2x128xf32> to vector<2x32xf32>
    %96 = vector.extract_strided_slice %87 {offsets = [0, 64], sizes = [2, 32], strides = [1, 1]} : vector<2x128xf32> to vector<2x32xf32>
    %97 = math.tanh %96 : vector<2x32xf32>
    %98 = arith.mulf %94, %80 : vector<2x32xf32>
    %99 = arith.mulf %93, %97 : vector<2x32xf32>
    %100 = arith.addf %98, %99 : vector<2x32xf32>
    %101 = math.tanh %100 : vector<2x32xf32>
    %102 = arith.mulf %95, %101 : vector<2x32xf32>
    %c5 = arith.constant 5 : index
    %c0_23 = arith.constant 0 : index
    %c0_24 = arith.constant 0 : index
    %103 = vector.load %arg0[%c5, %c0_23, %c0_24] : memref<8x2x128xf32, #tpu.memory_space<vmem>>, vector<1x2x128xf32>
    %104 = vector.shape_cast %103 : vector<1x2x128xf32> to vector<2x128xf32>
    %105 = arith.truncf %102 : vector<2x32xf32> to vector<2x32xbf16>
    %cst_25 = arith.constant dense<0.000000e+00> : vector<2x128xf32>
    %106 = tpu.matmul %105, %0, %cst_25 {dimension_numbers = #tpu.dot_dimension_numbers<[1], [0], [0], [1], [0, 0, 1, 1], [], []>} : vector<2x32xbf16>, vector<32x128xbf16>, vector<2x128xf32> -> vector<2x128xf32>
    %107 = arith.addf %104, %106 : vector<2x128xf32>
    %108 = arith.negf %107 : vector<2x128xf32>
    %109 = math.exp %108 : vector<2x128xf32>
    %cst_26 = arith.constant 1.000000e+00 : f32
    %110 = vector.broadcast %cst_26 : f32 to vector<2x128xf32>
    %111 = arith.addf %110, %109 : vector<2x128xf32>
    %112 = arith.divf %110, %111 : vector<2x128xf32>
    %113 = vector.extract_strided_slice %112 {offsets = [0, 0], sizes = [2, 32], strides = [1, 1]} : vector<2x128xf32> to vector<2x32xf32>
    %114 = vector.extract_strided_slice %112 {offsets = [0, 32], sizes = [2, 32], strides = [1, 1]} : vector<2x128xf32> to vector<2x32xf32>
    %115 = vector.extract_strided_slice %112 {offsets = [0, 96], sizes = [2, 32], strides = [1, 1]} : vector<2x128xf32> to vector<2x32xf32>
    %116 = vector.extract_strided_slice %107 {offsets = [0, 64], sizes = [2, 32], strides = [1, 1]} : vector<2x128xf32> to vector<2x32xf32>
    %117 = math.tanh %116 : vector<2x32xf32>
    %118 = arith.mulf %114, %100 : vector<2x32xf32>
    %119 = arith.mulf %113, %117 : vector<2x32xf32>
    %120 = arith.addf %118, %119 : vector<2x32xf32>
    %121 = math.tanh %120 : vector<2x32xf32>
    %122 = arith.mulf %115, %121 : vector<2x32xf32>
    %c6 = arith.constant 6 : index
    %c0_27 = arith.constant 0 : index
    %c0_28 = arith.constant 0 : index
    %123 = vector.load %arg0[%c6, %c0_27, %c0_28] : memref<8x2x128xf32, #tpu.memory_space<vmem>>, vector<1x2x128xf32>
    %124 = vector.shape_cast %123 : vector<1x2x128xf32> to vector<2x128xf32>
    %125 = arith.truncf %122 : vector<2x32xf32> to vector<2x32xbf16>
    %cst_29 = arith.constant dense<0.000000e+00> : vector<2x128xf32>
    %126 = tpu.matmul %125, %0, %cst_29 {dimension_numbers = #tpu.dot_dimension_numbers<[1], [0], [0], [1], [0, 0, 1, 1], [], []>} : vector<2x32xbf16>, vector<32x128xbf16>, vector<2x128xf32> -> vector<2x128xf32>
    %127 = arith.addf %124, %126 : vector<2x128xf32>
    %128 = arith.negf %127 : vector<2x128xf32>
    %129 = math.exp %128 : vector<2x128xf32>
    %cst_30 = arith.constant 1.000000e+00 : f32
    %130 = vector.broadcast %cst_30 : f32 to vector<2x128xf32>
    %131 = arith.addf %130, %129 : vector<2x128xf32>
    %132 = arith.divf %130, %131 : vector<2x128xf32>
    %133 = vector.extract_strided_slice %132 {offsets = [0, 0], sizes = [2, 32], strides = [1, 1]} : vector<2x128xf32> to vector<2x32xf32>
    %134 = vector.extract_strided_slice %132 {offsets = [0, 32], sizes = [2, 32], strides = [1, 1]} : vector<2x128xf32> to vector<2x32xf32>
    %135 = vector.extract_strided_slice %132 {offsets = [0, 96], sizes = [2, 32], strides = [1, 1]} : vector<2x128xf32> to vector<2x32xf32>
    %136 = vector.extract_strided_slice %127 {offsets = [0, 64], sizes = [2, 32], strides = [1, 1]} : vector<2x128xf32> to vector<2x32xf32>
    %137 = math.tanh %136 : vector<2x32xf32>
    %138 = arith.mulf %134, %120 : vector<2x32xf32>
    %139 = arith.mulf %133, %137 : vector<2x32xf32>
    %140 = arith.addf %138, %139 : vector<2x32xf32>
    %141 = math.tanh %140 : vector<2x32xf32>
    %142 = arith.mulf %135, %141 : vector<2x32xf32>
    %c7 = arith.constant 7 : index
    %c0_31 = arith.constant 0 : index
    %c0_32 = arith.constant 0 : index
    %143 = vector.load %arg0[%c7, %c0_31, %c0_32] : memref<8x2x128xf32, #tpu.memory_space<vmem>>, vector<1x2x128xf32>
    %144 = vector.shape_cast %143 : vector<1x2x128xf32> to vector<2x128xf32>
    %145 = arith.truncf %142 : vector<2x32xf32> to vector<2x32xbf16>
    %cst_33 = arith.constant dense<0.000000e+00> : vector<2x128xf32>
    %146 = tpu.matmul %145, %0, %cst_33 {dimension_numbers = #tpu.dot_dimension_numbers<[1], [0], [0], [1], [0, 0, 1, 1], [], []>} : vector<2x32xbf16>, vector<32x128xbf16>, vector<2x128xf32> -> vector<2x128xf32>
    %147 = arith.addf %144, %146 : vector<2x128xf32>
    %148 = arith.negf %147 : vector<2x128xf32>
    %149 = math.exp %148 : vector<2x128xf32>
    %cst_34 = arith.constant 1.000000e+00 : f32
    %150 = vector.broadcast %cst_34 : f32 to vector<2x128xf32>
    %151 = arith.addf %150, %149 : vector<2x128xf32>
    %152 = arith.divf %150, %151 : vector<2x128xf32>
    %153 = vector.extract_strided_slice %152 {offsets = [0, 0], sizes = [2, 32], strides = [1, 1]} : vector<2x128xf32> to vector<2x32xf32>
    %154 = vector.extract_strided_slice %152 {offsets = [0, 32], sizes = [2, 32], strides = [1, 1]} : vector<2x128xf32> to vector<2x32xf32>
    %155 = vector.extract_strided_slice %152 {offsets = [0, 96], sizes = [2, 32], strides = [1, 1]} : vector<2x128xf32> to vector<2x32xf32>
    %156 = vector.extract_strided_slice %147 {offsets = [0, 64], sizes = [2, 32], strides = [1, 1]} : vector<2x128xf32> to vector<2x32xf32>
    %157 = math.tanh %156 : vector<2x32xf32>
    %158 = arith.mulf %154, %140 : vector<2x32xf32>
    %159 = arith.mulf %153, %157 : vector<2x32xf32>
    %160 = arith.addf %158, %159 : vector<2x32xf32>
    %161 = math.tanh %160 : vector<2x32xf32>
    %162 = arith.mulf %155, %161 : vector<2x32xf32>
    %c0_35 = arith.constant 0 : index
    %c0_36 = arith.constant 0 : index
    %163 = vector.load %arg2[%c0_35, %c0_36] : memref<32x128xf32, #tpu.memory_space<vmem>>, vector<32x128xf32>
    %cst_37 = arith.constant dense<0.000000e+00> : vector<2x128xf32>
    %164 = tpu.matmul %162, %163, %cst_37 {dimension_numbers = #tpu.dot_dimension_numbers<[1], [0], [0], [1], [0, 0, 1, 1], [], []>} : vector<2x32xf32>, vector<32x128xf32>, vector<2x128xf32> -> vector<2x128xf32>
    %c0_38 = arith.constant 0 : index
    %c0_39 = arith.constant 0 : index
    %165 = vector.load %arg3[%c0_38, %c0_39] : memref<1x128xf32, #tpu.memory_space<vmem>>, vector<1x128xf32>
    %166 = vector.broadcast %165 : vector<1x128xf32> to vector<2x128xf32>
    %167 = arith.addf %164, %166 : vector<2x128xf32>
    %c0_40 = arith.constant 0 : index
    %c0_41 = arith.constant 0 : index
    %168 = vector.load %arg4[%c0_40, %c0_41] : memref<2x128xf32, #tpu.memory_space<vmem>>, vector<2x128xf32>
    tpu.vector_store %arg4[%c0_40, %c0_41], %167 {strides = array<i32>} : memref<2x128xf32, #tpu.memory_space<vmem>>, vector<2x128xf32>,
    return
  }
}

</mosaic_0001>

<llo_original>
// kernel: tpu_custom_call.1
$region0: #{tpu_custom_call.1}
  #allocation0 [shape = 'u32[]', space=smem, size = 0x4, offset = 0x4, fixed_abs, tag = 'smem constant byte address 0x4 - core index']
  #allocation1 [shape = 'u32[144,128]{1,0:T(1,128)}', space=vmem, size = 0x12000, scoped, tag = 'internal scratch']
  %s0 = inlined_call_operand.hbm [shape: f32[8,2,128], index: 0, kind: input, shape index: {}]
  %s1 = inlined_call_operand.hbm [shape: bf16[32,128], index: 1, kind: input, shape index: {}]
  %s2 = inlined_call_operand.hbm [shape: f32[32,128], index: 2, kind: input, shape index: {}]
  %s3 = inlined_call_operand.vmem [shape: f32[1,128], index: 3, kind: input, shape index: {}]
  %s4 = inlined_call_operand.hbm [shape: f32[2,128], index: 4, kind: output, shape index: {}]
  %s5 = sld [smem:[#allocation0]]
  $region38: #{tpu_custom_call.1} parent=0
    _
  %s7 = ssub.s32 1, %s5
  %s8 = scalar_select 0, %s7, %s5
  $region1: #{tpu_custom_call.1} parent=0
    #allocation2 [shape = 'u8[8192]{0}', space=vmem, size = 0x2000, scoped, tag = 'input window, operand 0, single buffered']
    #allocation3 [shape = 's32[1]{0}', space=sflag, size = 0x4, scoped, tag = 'scoped memory for tpu_custom_call.1']
    #allocation4 [shape = 's32[1]{0}', space=sflag, size = 0x4, scoped, tag = 'scoped memory for tpu_custom_call.1']
    #allocation5 [shape = 'u8[8192]{0}', space=vmem, size = 0x2000, scoped, tag = 'input window, operand 1, single buffered']
    #allocation6 [shape = 's32[1]{0}', space=sflag, size = 0x4, scoped, tag = 'scoped memory for tpu_custom_call.1']
    #allocation7 [shape = 'u8[16384]{0}', space=vmem, size = 0x4000, scoped, tag = 'input window, operand 2, single buffered']
    #allocation8 [shape = 'u8[1024]{0}', space=vmem, size = 0x400, scoped, tag = 'output window, operand 0, single buffered']
    %9 = vsyncpa [#allocation3], 0
    %10 = vsyncpa [#allocation6], 0
    %11 = vsyncpa [#allocation4], 0
    // Predicated region
    $region2: #{tpu_custom_call.1} parent=1 // pred_check
      _
    $region3: #{tpu_custom_call.1} parent=1 // pred_check_branch
      %13 = sbr.rel (0) target = $region5
    $region4: #{tpu_custom_call.1} parent=1 // pred_region
      %s15 = ssub.s32 256, 256
      %16 = vsyncadd [#allocation3], %s15
      %s17 = sshll.u32 [#allocation2], 4
      %s18 = int_to_ptr.vmem [resolvable:$true] %s17
      %23 = dma.hbm_to_vmem [thread:$0]  %s0, 256, %s18, [#allocation3], 32, 32, 2
    $region5: #{tpu_custom_call.1} parent=1 // pred_fallthru
      _
    // Predicated region
    $region6: #{tpu_custom_call.1} parent=1 // pred_check
      _
    $region7: #{tpu_custom_call.1} parent=1 // pred_check_branch
      %25 = sbr.rel (0) target = $region9
    $region8: #{tpu_custom_call.1} parent=1 // pred_region
      %s27 = ssub.s32 256, 256
      %28 = vsyncadd [#allocation6], %s27
      %s29 = sshll.u32 [#allocation5], 4
      %s30 = int_to_ptr.vmem [resolvable:$true] %s29
      %35 = dma.hbm_to_vmem [thread:$0]  %s1, 256, %s30, [#allocation6], 64, 64, 4
    $region9: #{tpu_custom_call.1} parent=1 // pred_fallthru
      _
    // Predicated region
    $region10: #{tpu_custom_call.1} parent=1 // pred_check
      _
    $region11: #{tpu_custom_call.1} parent=1 // pred_check_branch
      %37 = sbr.rel (0) target = $region13
    $region12: #{tpu_custom_call.1} parent=1 // pred_region
      %s39 = ssub.s32 512, 512
      %40 = vsyncadd [#allocation6], %s39
      %s41 = sshll.u32 [#allocation7], 4
      %s42 = int_to_ptr.vmem [resolvable:$true] %s41
      %47 = dma.hbm_to_vmem [thread:$0]  %s2, 512, %s42, [#allocation6], 128, 128, 8
    $region13: #{tpu_custom_call.1} parent=1 // pred_fallthru
      _
    // Predicated region
    $region14: #{tpu_custom_call.1} parent=1 // pred_check
      _
    $region15: #{tpu_custom_call.1} parent=1 // pred_check_branch
      %49 = sbr.rel (0) target = $region17
    $region16: #{tpu_custom_call.1} parent=1 // pred_region
      _
    $region17: #{tpu_custom_call.1} parent=1 // pred_fallthru
      _
    // Predicated region
    $region18: #{tpu_custom_call.1} parent=1 // pred_check
      _
    $region19: #{tpu_custom_call.1} parent=1 // pred_check_branch
      %51 = sbr.rel (0) target = $region21
    $region20: #{tpu_custom_call.1} parent=1 // pred_region
      %52 = dma.done [#allocation3], 256
    $region21: #{tpu_custom_call.1} parent=1 // pred_fallthru
      _
    // Predicated region
    $region22: #{tpu_custom_call.1} parent=1 // pred_check
      _
    $region23: #{tpu_custom_call.1} parent=1 // pred_check_branch
      %54 = sbr.rel (0) target = $region25
    $region24: #{tpu_custom_call.1} parent=1 // pred_region
      %55 = dma.done [#allocation6], 256
    $region25: #{tpu_custom_call.1} parent=1 // pred_fallthru
      _
    // Predicated region
    $region26: #{tpu_custom_call.1} parent=1 // pred_check
      _
    $region27: #{tpu_custom_call.1} parent=1 // pred_check_branch
      %57 = sbr.rel (0) target = $region29
    $region28: #{tpu_custom_call.1} parent=1 // pred_region
      %58 = dma.done [#allocation6], 512
    $region29: #{tpu_custom_call.1} parent=1 // pred_fallthru
      _
    %v60 = vld [vmem:[#allocation5] sm:$0xf]
    %v61 = vld [vmem:[#allocation5 + $0x4] sm:$0xf]
    %v62 = vld [vmem:[#allocation5 + $0x8] sm:$0xf]
    %v63 = vld [vmem:[#allocation5 + $0xc] sm:$0xf]
    %v64 = vld [vmem:[#allocation2] sm:$0x3]
    %v69 = vunpack.c.l.b16 %v60
    %v70 = vunpack.c.l.b16 %v61
    %v71 = vunpack.c.l.b16 %v62
    %v72 = vunpack.c.l.b16 %v63
    %v73 = vpack.c.b16 %v70, %v69
    %v74 = vpack.c.b16 %v72, %v71
    %vm77 = vcmask 261120
    %v79 = vsel %vm77, 0, 0
    %81 = vmatprep.subr.bf16.mxu0 0
    %82 = vmatpush1.bf16.msra.mxu0 0
    %83 = vmatprep.subr.bf16.mxu0 0
    %84 = vmatpush1.bf16.msra.mxu0 0
    %85 = vmatprep.subr.bf16.mxu0 0
    %86 = vmatpush1.bf16.msra.mxu0 0
    %87 = vmatprep.subr.bf16.mxu0 0
    %88 = vmatpush1.bf16.msra.mxu0 0
    %89 = vmatprep.subr.bf16.mxu0 0
    %90 = vmatpush1.bf16.msra.mxu0 0
    %91 = vmatprep.subr.bf16.mxu0 0
    %92 = vmatpush1.bf16.msra.mxu0 0
    %93 = vmatprep.subr.bf16.mxu0 0
    %94 = vmatpush1.bf16.msra.mxu0 %v74
    %95 = vmatprep.subr.bf16.mxu0 0
    %96 = vmatpush1.bf16.msra.mxu0 %v73
    %97 = vmatprep.subr.bf16.mxu0 0
    %98 = vmatpush2.bf16.msra.mxu0 0
    %99 = vmatprep.subr.bf16.mxu0 0
    %100 = vmatpush2.bf16.msra.mxu0 0
    %101 = vmatprep.subr.bf16.mxu0 0
    %102 = vmatpush2.bf16.msra.mxu0 0
    %103 = vmatprep.subr.bf16.mxu0 0
    %104 = vmatpush2.bf16.msra.mxu0 0
    %105 = vmatprep.subr.bf16.mxu0 0
    %106 = vmatpush2.bf16.msra.mxu0 0
    %107 = vmatprep.subr.bf16.mxu0 0
    %108 = vmatpush2.bf16.msra.mxu0 0
    %109 = vmatprep.subr.bf16.mxu0 0
    %110 = vmatpush2.bf16.msra.mxu0 0
    %111 = vmatprep.subr.bf16.mxu0 0
    %112 = vmatpush2.bf16.msra.mxu0 0
    %113 = vmatprep.mubr.bf16.mxu0 0
    %114 = vmatmul.mubr.bf16.gmra.mxu0 %v79
    %v115 = vpop.f32.mrf.mxu0
    %v116 = vadd.f32 0.0, %v115
    %v117 = vpop.f32.mrf.mxu0
    %v118 = vpop.f32.mrf.mxu0
    %v119 = vpop.f32.mrf.mxu0
    %120 = vdwg.mxu0
    %v121 = vadd.f32 %v64, %v116
    %v122 = vxor.u32 %v121, 2147483648
    %v123 = vmul.f32 %v122, 1.442695
    %v124 = vpow.pop %v123
    %v125 = vadd.f32 %v124, 1.0
    %v126 = vrcp.pop %v125
    %v127 = vmul.f32 1.0, %v126
    %v128 = vtanh.pop %v121
    %v129 = vmul.f32 %v127, 0.0
    %131 = vrot.lane.b32.xlu0 %v128, 64
    %v132 = vpop.permute.xlu0 %131
    %v134 = vmul.f32 %v127, %v132
    %136 = vrot.lane.b32.xlu0 %v134, 32
    %v137 = vpop.permute.xlu0 %136
    %v139 = vadd.f32 %v129, %v137
    %v140 = vtanh.pop %v139
    %142 = vrot.lane.b32.xlu0 %v140, 64
    %v143 = vpop.permute.xlu0 %142
    %v145 = vmul.f32 %v127, %v143
    %s146 = scalar_lea.vmem [#allocation2], 2
    %v147 = vld [vmem:[%s146] sm:$0x3]
    %v148 = vpack.c.bf16 %v145, %v145
    %150 = vrot.lane.b32.xlu0 %v148, 32
    %v151 = vpop.permute.xlu0 %150
    %v153 = vsel %vm77, %v151, 0
    %155 = vmatprep.subr.bf16.mxu0 0
    %156 = vmatpush1.bf16.msra.mxu0 0
    %157 = vmatprep.subr.bf16.mxu0 0
    %158 = vmatpush1.bf16.msra.mxu0 0
    %159 = vmatprep.subr.bf16.mxu0 0
    %160 = vmatpush1.bf16.msra.mxu0 0
    %161 = vmatprep.subr.bf16.mxu0 0
    %162 = vmatpush1.bf16.msra.mxu0 0
    %163 = vmatprep.subr.bf16.mxu0 0
    %164 = vmatpush1.bf16.msra.mxu0 0
    %165 = vmatprep.subr.bf16.mxu0 0
    %166 = vmatpush1.bf16.msra.mxu0 0
    %167 = vmatprep.subr.bf16.mxu0 0
    %168 = vmatpush1.bf16.msra.mxu0 %v74
    %169 = vmatprep.subr.bf16.mxu0 0
    %170 = vmatpush1.bf16.msra.mxu0 %v73
    %171 = vmatprep.subr.bf16.mxu0 0
    %172 = vmatpush2.bf16.msra.mxu0 0
    %173 = vmatprep.subr.bf16.mxu0 0
    %174 = vmatpush2.bf16.msra.mxu0 0
    %175 = vmatprep.subr.bf16.mxu0 0
    %176 = vmatpush2.bf16.msra.mxu0 0
    %177 = vmatprep.subr.bf16.mxu0 0
    %178 = vmatpush2.bf16.msra.mxu0 0
    %179 = vmatprep.subr.bf16.mxu0 0
    %180 = vmatpush2.bf16.msra.mxu0 0
    %181 = vmatprep.subr.bf16.mxu0 0
    %182 = vmatpush2.bf16.msra.mxu0 0
    %183 = vmatprep.subr.bf16.mxu0 0
    %184 = vmatpush2.bf16.msra.mxu0 0
    %185 = vmatprep.subr.bf16.mxu0 0
    %186 = vmatpush2.bf16.msra.mxu0 0
    %187 = vmatprep.mubr.bf16.mxu0 0
    %188 = vmatmul.mubr.bf16.gmra.mxu0 %v153
    %v189 = vpop.f32.mrf.mxu0
    %v190 = vadd.f32 0.0, %v189
    %v191 = vpop.f32.mrf.mxu0
    %v192 = vpop.f32.mrf.mxu0
    %v193 = vpop.f32.mrf.mxu0
    %194 = vdwg.mxu0
    %v195 = vadd.f32 %v147, %v190
    %v196 = vxor.u32 %v195, 2147483648
    %v197 = vmul.f32 %v196, 1.442695
    %v198 = vpow.pop %v197
    %v199 = vadd.f32 %v198, 1.0
    %v200 = vrcp.pop %v199
    %v201 = vmul.f32 1.0, %v200
    %v202 = vtanh.pop %v195
    %v203 = vmul.f32 %v201, %v139
    %205 = vrot.lane.b32.xlu0 %v202, 64
    %v206 = vpop.permute.xlu0 %205
    %v208 = vmul.f32 %v201, %v206
    %210 = vrot.lane.b32.xlu0 %v208, 32
    %v211 = vpop.permute.xlu0 %210
    %v213 = vadd.f32 %v203, %v211
    %v214 = vtanh.pop %v213
    %216 = vrot.lane.b32.xlu0 %v214, 64
    %v217 = vpop.permute.xlu0 %216
    %v219 = vmul.f32 %v201, %v217
    %s220 = scalar_lea.vmem [#allocation2], 4
    %v221 = vld [vmem:[%s220] sm:$0x3]
    %v222 = vpack.c.bf16 %v219, %v219
    %224 = vrot.lane.b32.xlu0 %v222, 32
    %v225 = vpop.permute.xlu0 %224
    %v227 = vsel %vm77, %v225, 0
    %229 = vmatprep.subr.bf16.mxu0 0
    %230 = vmatpush1.bf16.msra.mxu0 0
    %231 = vmatprep.subr.bf16.mxu0 0
    %232 = vmatpush1.bf16.msra.mxu0 0
    %233 = vmatprep.subr.bf16.mxu0 0
    %234 = vmatpush1.bf16.msra.mxu0 0
    %235 = vmatprep.subr.bf16.mxu0 0
    %236 = vmatpush1.bf16.msra.mxu0 0
    %237 = vmatprep.subr.bf16.mxu0 0
    %238 = vmatpush1.bf16.msra.mxu0 0
    %239 = vmatprep.subr.bf16.mxu0 0
    %240 = vmatpush1.bf16.msra.mxu0 0
    %241 = vmatprep.subr.bf16.mxu0 0
    %242 = vmatpush1.bf16.msra.mxu0 %v74
    %243 = vmatprep.subr.bf16.mxu0 0
    %244 = vmatpush1.bf16.msra.mxu0 %v73
    %245 = vmatprep.subr.bf16.mxu0 0
    %246 = vmatpush2.bf16.msra.mxu0 0
    %247 = vmatprep.subr.bf16.mxu0 0
    %248 = vmatpush2.bf16.msra.mxu0 0
    %249 = vmatprep.subr.bf16.mxu0 0
    %250 = vmatpush2.bf16.msra.mxu0 0
    %251 = vmatprep.subr.bf16.mxu0 0
    %252 = vmatpush2.bf16.msra.mxu0 0
    %253 = vmatprep.subr.bf16.mxu0 0
    %254 = vmatpush2.bf16.msra.mxu0 0
    %255 = vmatprep.subr.bf16.mxu0 0
    %256 = vmatpush2.bf16.msra.mxu0 0
    %257 = vmatprep.subr.bf16.mxu0 0
    %258 = vmatpush2.bf16.msra.mxu0 0
    %259 = vmatprep.subr.bf16.mxu0 0
    %260 = vmatpush2.bf16.msra.mxu0 0
    %261 = vmatprep.mubr.bf16.mxu0 0
    %262 = vmatmul.mubr.bf16.gmra.mxu0 %v227
    %v263 = vpop.f32.mrf.mxu0
    %v264 = vadd.f32 0.0, %v263
    %v265 = vpop.f32.mrf.mxu0
    %v266 = vpop.f32.mrf.mxu0
    %v267 = vpop.f32.mrf.mxu0
    %268 = vdwg.mxu0
    %v269 = vadd.f32 %v221, %v264
    %v270 = vxor.u32 %v269, 2147483648
    %v271 = vmul.f32 %v270, 1.442695
    %v272 = vpow.pop %v271
    %v273 = vadd.f32 %v272, 1.0
    %v274 = vrcp.pop %v273
    %v275 = vmul.f32 1.0, %v274
    %v276 = vtanh.pop %v269
    %v277 = vmul.f32 %v275, %v213
    %279 = vrot.lane.b32.xlu0 %v276, 64
    %v280 = vpop.permute.xlu0 %279
    %v282 = vmul.f32 %v275, %v280
    %284 = vrot.lane.b32.xlu0 %v282, 32
    %v285 = vpop.permute.xlu0 %284
    %v287 = vadd.f32 %v277, %v285
    %v288 = vtanh.pop %v287
    %290 = vrot.lane.b32.xlu0 %v288, 64
    %v291 = vpop.permute.xlu0 %290
    %v293 = vmul.f32 %v275, %v291
    %s294 = scalar_lea.vmem [#allocation2], 6
    %v295 = vld [vmem:[%s294] sm:$0x3]
    %v296 = vpack.c.bf16 %v293, %v293
    %298 = vrot.lane.b32.xlu0 %v296, 32
    %v299 = vpop.permute.xlu0 %298
    %v301 = vsel %vm77, %v299, 0
    %303 = vmatprep.subr.bf16.mxu0 0
    %304 = vmatpush1.bf16.msra.mxu0 0
    %305 = vmatprep.subr.bf16.mxu0 0
    %306 = vmatpush1.bf16.msra.mxu0 0
    %307 = vmatprep.subr.bf16.mxu0 0
    %308 = vmatpush1.bf16.msra.mxu0 0
    %309 = vmatprep.subr.bf16.mxu0 0
    %310 = vmatpush1.bf16.msra.mxu0 0
    %311 = vmatprep.subr.bf16.mxu0 0
    %312 = vmatpush1.bf16.msra.mxu0 0
    %313 = vmatprep.subr.bf16.mxu0 0
    %314 = vmatpush1.bf16.msra.mxu0 0
    %315 = vmatprep.subr.bf16.mxu0 0
    %316 = vmatpush1.bf16.msra.mxu0 %v74
    %317 = vmatprep.subr.bf16.mxu0 0
    %318 = vmatpush1.bf16.msra.mxu0 %v73
    %319 = vmatprep.subr.bf16.mxu0 0
    %320 = vmatpush2.bf16.msra.mxu0 0
    %321 = vmatprep.subr.bf16.mxu0 0
    %322 = vmatpush2.bf16.msra.mxu0 0
    %323 = vmatprep.subr.bf16.mxu0 0
    %324 = vmatpush2.bf16.msra.mxu0 0
    %325 = vmatprep.subr.bf16.mxu0 0
    %326 = vmatpush2.bf16.msra.mxu0 0
    %327 = vmatprep.subr.bf16.mxu0 0
    %328 = vmatpush2.bf16.msra.mxu0 0
    %329 = vmatprep.subr.bf16.mxu0 0
    %330 = vmatpush2.bf16.msra.mxu0 0
    %331 = vmatprep.subr.bf16.mxu0 0
    %332 = vmatpush2.bf16.msra.mxu0 0
    %333 = vmatprep.subr.bf16.mxu0 0
    %334 = vmatpush2.bf16.msra.mxu0 0
    %335 = vmatprep.mubr.bf16.mxu0 0
    %336 = vmatmul.mubr.bf16.gmra.mxu0 %v301
    %v337 = vpop.f32.mrf.mxu0
    %v338 = vadd.f32 0.0, %v337
    %v339 = vpop.f32.mrf.mxu0
    %v340 = vpop.f32.mrf.mxu0
    %v341 = vpop.f32.mrf.mxu0
    %342 = vdwg.mxu0
    %v343 = vadd.f32 %v295, %v338
    %v344 = vxor.u32 %v343, 2147483648
    %v345 = vmul.f32 %v344, 1.442695
    %v346 = vpow.pop %v345
    %v347 = vadd.f32 %v346, 1.0
    %v348 = vrcp.pop %v347
    %v349 = vmul.f32 1.0, %v348
    %v350 = vtanh.pop %v343
    %v351 = vmul.f32 %v349, %v287
    %353 = vrot.lane.b32.xlu0 %v350, 64
    %v354 = vpop.permute.xlu0 %353
    %v356 = vmul.f32 %v349, %v354
    %358 = vrot.lane.b32.xlu0 %v356, 32
    %v359 = vpop.permute.xlu0 %358
    %v361 = vadd.f32 %v351, %v359
    %v362 = vtanh.pop %v361
    %364 = vrot.lane.b32.xlu0 %v362, 64
    %v365 = vpop.permute.xlu0 %364
    %v367 = vmul.f32 %v349, %v365
    %s368 = scalar_lea.vmem [#allocation2], 8
    %v369 = vld [vmem:[%s368] sm:$0x3]
    %v370 = vpack.c.bf16 %v367, %v367
    %372 = vrot.lane.b32.xlu0 %v370, 32
    %v373 = vpop.permute.xlu0 %372
    %v375 = vsel %vm77, %v373, 0
    %377 = vmatprep.subr.bf16.mxu0 0
    %378 = vmatpush1.bf16.msra.mxu0 0
    %379 = vmatprep.subr.bf16.mxu0 0
    %380 = vmatpush1.bf16.msra.mxu0 0
    %381 = vmatprep.subr.bf16.mxu0 0
    %382 = vmatpush1.bf16.msra.mxu0 0
    %383 = vmatprep.subr.bf16.mxu0 0
    %384 = vmatpush1.bf16.msra.mxu0 0
    %385 = vmatprep.subr.bf16.mxu0 0
    %386 = vmatpush1.bf16.msra.mxu0 0
    %387 = vmatprep.subr.bf16.mxu0 0
    %388 = vmatpush1.bf16.msra.mxu0 0
    %389 = vmatprep.subr.bf16.mxu0 0
    %390 = vmatpush1.bf16.msra.mxu0 %v74
    %391 = vmatprep.subr.bf16.mxu0 0
    %392 = vmatpush1.bf16.msra.mxu0 %v73
    %393 = vmatprep.subr.bf16.mxu0 0
    %394 = vmatpush2.bf16.msra.mxu0 0
    %395 = vmatprep.subr.bf16.mxu0 0
    %396 = vmatpush2.bf16.msra.mxu0 0
    %397 = vmatprep.subr.bf16.mxu0 0
    %398 = vmatpush2.bf16.msra.mxu0 0
    %399 = vmatprep.subr.bf16.mxu0 0
    %400 = vmatpush2.bf16.msra.mxu0 0
    %401 = vmatprep.subr.bf16.mxu0 0
    %402 = vmatpush2.bf16.msra.mxu0 0
    %403 = vmatprep.subr.bf16.mxu0 0
    %404 = vmatpush2.bf16.msra.mxu0 0
    %405 = vmatprep.subr.bf16.mxu0 0
    %406 = vmatpush2.bf16.msra.mxu0 0
    %407 = vmatprep.subr.bf16.mxu0 0
    %408 = vmatpush2.bf16.msra.mxu0 0
    %409 = vmatprep.mubr.bf16.mxu0 0
    %410 = vmatmul.mubr.bf16.gmra.mxu0 %v375
    %v411 = vpop.f32.mrf.mxu0
    %v412 = vadd.f32 0.0, %v411
    %v413 = vpop.f32.mrf.mxu0
    %v414 = vpop.f32.mrf.mxu0
    %v415 = vpop.f32.mrf.mxu0
    %416 = vdwg.mxu0
    %v417 = vadd.f32 %v369, %v412
    %v418 = vxor.u32 %v417, 2147483648
    %v419 = vmul.f32 %v418, 1.442695
    %v420 = vpow.pop %v419
    %v421 = vadd.f32 %v420, 1.0
    %v422 = vrcp.pop %v421
    %v423 = vmul.f32 1.0, %v422
    %v424 = vtanh.pop %v417
    %v425 = vmul.f32 %v423, %v361
    %427 = vrot.lane.b32.xlu0 %v424, 64
    %v428 = vpop.permute.xlu0 %427
    %v430 = vmul.f32 %v423, %v428
    %432 = vrot.lane.b32.xlu0 %v430, 32
    %v433 = vpop.permute.xlu0 %432
    %v435 = vadd.f32 %v425, %v433
    %v436 = vtanh.pop %v435
    %438 = vrot.lane.b32.xlu0 %v436, 64
    %v439 = vpop.permute.xlu0 %438
    %v441 = vmul.f32 %v423, %v439
    %s442 = scalar_lea.vmem [#allocation2], 10
    %v443 = vld [vmem:[%s442] sm:$0x3]
    %v444 = vpack.c.bf16 %v441, %v441
    %446 = vrot.lane.b32.xlu0 %v444, 32
    %v447 = vpop.permute.xlu0 %446
    %v449 = vsel %vm77, %v447, 0
    %451 = vmatprep.subr.bf16.mxu0 0
    %452 = vmatpush1.bf16.msra.mxu0 0
    %453 = vmatprep.subr.bf16.mxu0 0
    %454 = vmatpush1.bf16.msra.mxu0 0
    %455 = vmatprep.subr.bf16.mxu0 0
    %456 = vmatpush1.bf16.msra.mxu0 0
    %457 = vmatprep.subr.bf16.mxu0 0
    %458 = vmatpush1.bf16.msra.mxu0 0
    %459 = vmatprep.subr.bf16.mxu0 0
    %460 = vmatpush1.bf16.msra.mxu0 0
    %461 = vmatprep.subr.bf16.mxu0 0
    %462 = vmatpush1.bf16.msra.mxu0 0
    %463 = vmatprep.subr.bf16.mxu0 0
    %464 = vmatpush1.bf16.msra.mxu0 %v74
    %465 = vmatprep.subr.bf16.mxu0 0
    %466 = vmatpush1.bf16.msra.mxu0 %v73
    %467 = vmatprep.subr.bf16.mxu0 0
    %468 = vmatpush2.bf16.msra.mxu0 0
    %469 = vmatprep.subr.bf16.mxu0 0
    %470 = vmatpush2.bf16.msra.mxu0 0
    %471 = vmatprep.subr.bf16.mxu0 0
    %472 = vmatpush2.bf16.msra.mxu0 0
    %473 = vmatprep.subr.bf16.mxu0 0
    %474 = vmatpush2.bf16.msra.mxu0 0
    %475 = vmatprep.subr.bf16.mxu0 0
    %476 = vmatpush2.bf16.msra.mxu0 0
    %477 = vmatprep.subr.bf16.mxu0 0
    %478 = vmatpush2.bf16.msra.mxu0 0
    %479 = vmatprep.subr.bf16.mxu0 0
    %480 = vmatpush2.bf16.msra.mxu0 0
    %481 = vmatprep.subr.bf16.mxu0 0
    %482 = vmatpush2.bf16.msra.mxu0 0
    %483 = vmatprep.mubr.bf16.mxu0 0
    %484 = vmatmul.mubr.bf16.gmra.mxu0 %v449
    %v485 = vpop.f32.mrf.mxu0
    %v486 = vadd.f32 0.0, %v485
    %v487 = vpop.f32.mrf.mxu0
    %v488 = vpop.f32.mrf.mxu0
    %v489 = vpop.f32.mrf.mxu0
    %490 = vdwg.mxu0
    %v491 = vadd.f32 %v443, %v486
    %v492 = vxor.u32 %v491, 2147483648
    %v493 = vmul.f32 %v492, 1.442695
    %v494 = vpow.pop %v493
    %v495 = vadd.f32 %v494, 1.0
    %v496 = vrcp.pop %v495
    %v497 = vmul.f32 1.0, %v496
    %v498 = vtanh.pop %v491
    %v499 = vmul.f32 %v497, %v435
    %501 = vrot.lane.b32.xlu0 %v498, 64
    %v502 = vpop.permute.xlu0 %501
    %v504 = vmul.f32 %v497, %v502
    %506 = vrot.lane.b32.xlu0 %v504, 32
    %v507 = vpop.permute.xlu0 %506
    %v509 = vadd.f32 %v499, %v507
    %v510 = vtanh.pop %v509
    %512 = vrot.lane.b32.xlu0 %v510, 64
    %v513 = vpop.permute.xlu0 %512
    %v515 = vmul.f32 %v497, %v513
    %s516 = scalar_lea.vmem [#allocation2], 12
    %v517 = vld [vmem:[%s516] sm:$0x3]
    %v518 = vpack.c.bf16 %v515, %v515
    %520 = vrot.lane.b32.xlu0 %v518, 32
    %v521 = vpop.permute.xlu0 %520
    %v523 = vsel %vm77, %v521, 0
    %525 = vmatprep.subr.bf16.mxu0 0
    %526 = vmatpush1.bf16.msra.mxu0 0
    %527 = vmatprep.subr.bf16.mxu0 0
    %528 = vmatpush1.bf16.msra.mxu0 0
    %529 = vmatprep.subr.bf16.mxu0 0
    %530 = vmatpush1.bf16.msra.mxu0 0
    %531 = vmatprep.subr.bf16.mxu0 0
    %532 = vmatpush1.bf16.msra.mxu0 0
    %533 = vmatprep.subr.bf16.mxu0 0
    %534 = vmatpush1.bf16.msra.mxu0 0
    %535 = vmatprep.subr.bf16.mxu0 0
    %536 = vmatpush1.bf16.msra.mxu0 0
    %537 = vmatprep.subr.bf16.mxu0 0
    %538 = vmatpush1.bf16.msra.mxu0 %v74
    %539 = vmatprep.subr.bf16.mxu0 0
    %540 = vmatpush1.bf16.msra.mxu0 %v73
    %541 = vmatprep.subr.bf16.mxu0 0
    %542 = vmatpush2.bf16.msra.mxu0 0
    %543 = vmatprep.subr.bf16.mxu0 0
    %544 = vmatpush2.bf16.msra.mxu0 0
    %545 = vmatprep.subr.bf16.mxu0 0
    %546 = vmatpush2.bf16.msra.mxu0 0
    %547 = vmatprep.subr.bf16.mxu0 0
    %548 = vmatpush2.bf16.msra.mxu0 0
    %549 = vmatprep.subr.bf16.mxu0 0
    %550 = vmatpush2.bf16.msra.mxu0 0
    %551 = vmatprep.subr.bf16.mxu0 0
    %552 = vmatpush2.bf16.msra.mxu0 0
    %553 = vmatprep.subr.bf16.mxu0 0
    %554 = vmatpush2.bf16.msra.mxu0 0
    %555 = vmatprep.subr.bf16.mxu0 0
    %556 = vmatpush2.bf16.msra.mxu0 0
    %557 = vmatprep.mubr.bf16.mxu0 0
    %558 = vmatmul.mubr.bf16.gmra.mxu0 %v523
    %v559 = vpop.f32.mrf.mxu0
    %v560 = vadd.f32 0.0, %v559
    %v561 = vpop.f32.mrf.mxu0
    %v562 = vpop.f32.mrf.mxu0
    %v563 = vpop.f32.mrf.mxu0
    %564 = vdwg.mxu0
    %v565 = vadd.f32 %v517, %v560
    %v566 = vxor.u32 %v565, 2147483648
    %v567 = vmul.f32 %v566, 1.442695
    %v568 = vpow.pop %v567
    %v569 = vadd.f32 %v568, 1.0
    %v570 = vrcp.pop %v569
    %v571 = vmul.f32 1.0, %v570
    %v572 = vtanh.pop %v565
    %v573 = vmul.f32 %v571, %v509
    %575 = vrot.lane.b32.xlu0 %v572, 64
    %v576 = vpop.permute.xlu0 %575
    %v578 = vmul.f32 %v571, %v576
    %580 = vrot.lane.b32.xlu0 %v578, 32
    %v581 = vpop.permute.xlu0 %580
    %v583 = vadd.f32 %v573, %v581
    %v584 = vtanh.pop %v583
    %586 = vrot.lane.b32.xlu0 %v584, 64
    %v587 = vpop.permute.xlu0 %586
    %v589 = vmul.f32 %v571, %v587
    %s590 = scalar_lea.vmem [#allocation2], 14
    %v591 = vld [vmem:[%s590] sm:$0x3]
    %v592 = vpack.c.bf16 %v589, %v589
    %594 = vrot.lane.b32.xlu0 %v592, 32
    %v595 = vpop.permute.xlu0 %594
    %v597 = vsel %vm77, %v595, 0
    %599 = vmatprep.subr.bf16.mxu0 0
    %600 = vmatpush1.bf16.msra.mxu0 0
    %601 = vmatprep.subr.bf16.mxu0 0
    %602 = vmatpush1.bf16.msra.mxu0 0
    %603 = vmatprep.subr.bf16.mxu0 0
    %604 = vmatpush1.bf16.msra.mxu0 0
    %605 = vmatprep.subr.bf16.mxu0 0
    %606 = vmatpush1.bf16.msra.mxu0 0
    %607 = vmatprep.subr.bf16.mxu0 0
    %608 = vmatpush1.bf16.msra.mxu0 0
    %609 = vmatprep.subr.bf16.mxu0 0
    %610 = vmatpush1.bf16.msra.mxu0 0
    %611 = vmatprep.subr.bf16.mxu0 0
    %612 = vmatpush1.bf16.msra.mxu0 %v74
    %613 = vmatprep.subr.bf16.mxu0 0
    %614 = vmatpush1.bf16.msra.mxu0 %v73
    %615 = vmatprep.subr.bf16.mxu0 0
    %616 = vmatpush2.bf16.msra.mxu0 0
    %617 = vmatprep.subr.bf16.mxu0 0
    %618 = vmatpush2.bf16.msra.mxu0 0
    %619 = vmatprep.subr.bf16.mxu0 0
    %620 = vmatpush2.bf16.msra.mxu0 0
    %621 = vmatprep.subr.bf16.mxu0 0
    %622 = vmatpush2.bf16.msra.mxu0 0
    %623 = vmatprep.subr.bf16.mxu0 0
    %624 = vmatpush2.bf16.msra.mxu0 0
    %625 = vmatprep.subr.bf16.mxu0 0
    %626 = vmatpush2.bf16.msra.mxu0 0
    %627 = vmatprep.subr.bf16.mxu0 0
    %628 = vmatpush2.bf16.msra.mxu0 0
    %629 = vmatprep.subr.bf16.mxu0 0
    %630 = vmatpush2.bf16.msra.mxu0 0
    %631 = vmatprep.mubr.bf16.mxu0 0
    %632 = vmatmul.mubr.bf16.gmra.mxu0 %v597
    %v633 = vpop.f32.mrf.mxu0
    %v634 = vadd.f32 0.0, %v633
    %v635 = vpop.f32.mrf.mxu0
    %v636 = vpop.f32.mrf.mxu0
    %v637 = vpop.f32.mrf.mxu0
    %638 = vdwg.mxu0
    %v639 = vadd.f32 %v591, %v634
    %v640 = vxor.u32 %v639, 2147483648
    %v641 = vmul.f32 %v640, 1.442695
    %v642 = vpow.pop %v641
    %v643 = vadd.f32 %v642, 1.0
    %v644 = vrcp.pop %v643
    %v645 = vmul.f32 1.0, %v644
    %v646 = vtanh.pop %v639
    %v647 = vmul.f32 %v645, %v583
    %649 = vrot.lane.b32.xlu0 %v646, 64
    %v650 = vpop.permute.xlu0 %649
    %v652 = vmul.f32 %v645, %v650
    %654 = vrot.lane.b32.xlu0 %v652, 32
    %v655 = vpop.permute.xlu0 %654
    %v657 = vadd.f32 %v647, %v655
    %v658 = vtanh.pop %v657
    %660 = vrot.lane.b32.xlu0 %v658, 64
    %v661 = vpop.permute.xlu0 %660
    %v663 = vmul.f32 %v645, %v661
    %v664 = vld [vmem:[#allocation7] sm:$0xff]
    %v665 = vld [vmem:[#allocation7 + $0x8] sm:$0xff]
    %v666 = vld [vmem:[#allocation7 + $0x10] sm:$0xff]
    %v667 = vld [vmem:[#allocation7 + $0x18] sm:$0xff]
    %v668 = vld [vmem:[%s3] sm:$0x1]
    %v670 = vlaneseq
    %v671 = vshrl.u32 %v670, 7
    %v672 = vsub.s32 0, %v671
    %v673 = vrot.slane %v668, %v672
    %676 = vrot.lane.b32.xlu0 %v663, 32
    %v677 = vpop.permute.xlu0 %676
    %v678 = vsel %vm77, %v677, 0
    %680 = vmatprep.subr.mxu0 0.0
    %681 = vmatpush1.msra.mxu0 0.0
    %682 = vmatprep.subr.mxu0 0.0
    %683 = vmatpush1.msra.mxu0 0.0
    %684 = vmatprep.subr.mxu0 0.0
    %685 = vmatpush1.msra.mxu0 0.0
    %686 = vmatprep.subr.mxu0 0.0
    %687 = vmatpush1.msra.mxu0 0.0
    %688 = vmatprep.subr.mxu0 0.0
    %689 = vmatpush1.msra.mxu0 0.0
    %690 = vmatprep.subr.mxu0 0.0
    %691 = vmatpush1.msra.mxu0 0.0
    %692 = vmatprep.subr.mxu0 0.0
    %693 = vmatpush1.msra.mxu0 0.0
    %694 = vmatprep.subr.mxu0 0.0
    %695 = vmatpush1.msra.mxu0 0.0
    %696 = vmatprep.subr.mxu0 0.0
    %697 = vmatpush1.msra.mxu0 0.0
    %698 = vmatprep.subr.mxu0 0.0
    %699 = vmatpush1.msra.mxu0 0.0
    %700 = vmatprep.subr.mxu0 0.0
    %701 = vmatpush1.msra.mxu0 0.0
    %702 = vmatprep.subr.mxu0 0.0
    %703 = vmatpush1.msra.mxu0 0.0
    %704 = vmatprep.subr.mxu0 0.0
    %705 = vmatpush1.msra.mxu0 %v667
    %706 = vmatprep.subr.mxu0 0.0
    %707 = vmatpush1.msra.mxu0 %v666
    %708 = vmatprep.subr.mxu0 0.0
    %709 = vmatpush1.msra.mxu0 %v665
    %710 = vmatprep.subr.mxu0 0.0
    %711 = vmatpush1.msra.mxu0 %v664
    %712 = vmatprep.subr.mxu0 0.0
    %713 = vmatpush2.msra.mxu0 0.0
    %714 = vmatprep.subr.mxu0 0.0
    %715 = vmatpush2.msra.mxu0 0.0
    %716 = vmatprep.subr.mxu0 0.0
    %717 = vmatpush2.msra.mxu0 0.0
    %718 = vmatprep.subr.mxu0 0.0
    %719 = vmatpush2.msra.mxu0 0.0
    %720 = vmatprep.subr.mxu0 0.0
    %721 = vmatpush2.msra.mxu0 0.0
    %722 = vmatprep.subr.mxu0 0.0
    %723 = vmatpush2.msra.mxu0 0.0
    %724 = vmatprep.subr.mxu0 0.0
    %725 = vmatpush2.msra.mxu0 0.0
    %726 = vmatprep.subr.mxu0 0.0
    %727 = vmatpush2.msra.mxu0 0.0
    %728 = vmatprep.subr.mxu0 0.0
    %729 = vmatpush2.msra.mxu0 0.0
    %730 = vmatprep.subr.mxu0 0.0
    %731 = vmatpush2.msra.mxu0 0.0
    %732 = vmatprep.subr.mxu0 0.0
    %733 = vmatpush2.msra.mxu0 0.0
    %734 = vmatprep.subr.mxu0 0.0
    %735 = vmatpush2.msra.mxu0 0.0
    %736 = vmatprep.subr.mxu0 0.0
    %737 = vmatpush2.msra.mxu0 0.0
    %738 = vmatprep.subr.mxu0 0.0
    %739 = vmatpush2.msra.mxu0 0.0
    %740 = vmatprep.subr.mxu0 0.0
    %741 = vmatpush2.msra.mxu0 0.0
    %742 = vmatprep.subr.mxu0 0.0
    %743 = vmatpush2.msra.mxu0 0.0
    %744 = vmatprep.mubr.f32.mxu0 0.0
    %745 = vmatmul.mubr.f32.gmra.mxu0 %v678
    %v746 = vpop.f32.mrf.mxu0
    %v747 = vadd.f32 %v673, %v746
    %v748 = vpop.f32.mrf.mxu0
    %749 = vdwg.mxu0
    %750 = vst [vmem:[#allocation8] sm:$0x3] %v747
    // Predicated region
    $region30: #{tpu_custom_call.1} parent=1 // pred_check
      _
    $region31: #{tpu_custom_call.1} parent=1 // pred_check_branch
      %752 = sbr.rel (0) target = $region33
    $region32: #{tpu_custom_call.1} parent=1 // pred_region
      %s754 = ssub.s32 32, 32
      %755 = vsyncadd [#allocation4], %s754
      %s757 = sshll.u32 [#allocation8], 4
      %s758 = int_to_ptr.vmem [resolvable:$true] %s757
      %760 = dma.vmem_to_hbm [thread:$0]  %s758, 32, %s4, [#allocation4]
    $region33: #{tpu_custom_call.1} parent=1 // pred_fallthru
      _
    // Predicated region
    $region34: #{tpu_custom_call.1} parent=1 // pred_check
      _
    $region35: #{tpu_custom_call.1} parent=1 // pred_check_branch
      %762 = sbr.rel (0) target = $region37
    $region36: #{tpu_custom_call.1} parent=1 // pred_region
      %763 = dma.done [#allocation4], 32
    $region37: #{tpu_custom_call.1} parent=1 // pred_fallthru
      _
    %764 = vsyncpa [#allocation3], 1
    %765 = vsyncpa [#allocation6], 1
    %766 = vsyncpa [#allocation4], 1

</llo_original>
